<compile_context>
chip_gen: v7x
topology: tpu7x:2x2x1
jax: 0.10.0
libtpu: 0.0.40
codegen_flags: <defaults>
</compile_context>

<pallas_src>
import functools

import jax
import jax.numpy as jnp
from jax.experimental import pallas as pl
from jax.experimental.pallas import tpu as pltpu

BN_EPS = 1e-5


# ---------------------------------------------------------------------------
# Fused kernel: grid = (phase, batch_tile)
#   phase 0: h = x @ w1 + b1  -> VMEM scratch; accumulate sum / sumsq
#   phase 1: (first tile) fold BN stats into scale/shift;
#            every tile: relu(h * scale + shift) @ w2 + b2 -> out
# ---------------------------------------------------------------------------
def _projection_mlp_kernel(x_ref, w1_ref, b1_ref, gamma_ref, beta_ref,
                           w2_ref, b2_ref, o_ref,
                           h_scr, sum_scr, sumsq_scr, scale_scr, shift_scr,
                           *, inv_n):
    p = pl.program_id(0)   # phase
    i = pl.program_id(1)   # batch tile

    @pl.when(jnp.logical_and(p == 0, i == 0))
    def _init():
        sum_scr[...] = jnp.zeros_like(sum_scr)
        sumsq_scr[...] = jnp.zeros_like(sumsq_scr)

    @pl.when(p == 0)
    def _linear1_and_stats():
        # MXU matmul in the (bf16) compute dtype, f32 accumulation.
        h = jnp.dot(x_ref[...], w1_ref[...], preferred_element_type=jnp.float32)
        h = h + b1_ref[...].astype(jnp.float32)
        h_scr[i] = h.astype(h_scr.dtype)           # whole h stays in VMEM
        # Per-tile partial reductions over the batch (sublane) axis, in f32.
        sum_scr[...] += jnp.sum(h, axis=0, keepdims=True)
        sumsq_scr[...] += jnp.sum(h * h, axis=0, keepdims=True)

    @pl.when(jnp.logical_and(p == 1, i == 0))
    def _fold_bn_stats():
        # PyTorch BatchNorm1d training forward: batch mean, biased variance.
        # NOTE: E[h^2]-E[h]^2 in f32; fine for moderate B / |mean| ~ std.
        mean = sum_scr[...] * inv_n
        var = jnp.maximum(sumsq_scr[...] * inv_n - mean * mean, 0.0)
        inv_std = jax.lax.rsqrt(var + BN_EPS)
        scale = gamma_ref[...].astype(jnp.float32) * inv_std
        scale_scr[...] = scale
        shift_scr[...] = beta_ref[...].astype(jnp.float32) - mean * scale

    @pl.when(p == 1)
    def _bn_relu_linear2():
        h = h_scr[i].astype(jnp.float32)
        h_act = jnp.maximum(h * scale_scr[...] + shift_scr[...], 0.0)
        out = jnp.dot(h_act.astype(w2_ref.dtype), w2_ref[...],
                      preferred_element_type=jnp.float32)
        out = out + b2_ref[...].astype(jnp.float32)
        o_ref[...] = out.astype(o_ref.dtype)


# ---------------------------------------------------------------------------
# Wrapper
# ---------------------------------------------------------------------------
def _pad_axis(arr, axis, multiple):
    size = arr.shape[axis]
    pad = (-size) % multiple
    if pad == 0:
        return arr
    widths = [(0, 0)] * arr.ndim
    widths[axis] = (0, pad)
    return jnp.pad(arr, widths)


def _pick_batch_tile(batch, target):
    # Prefer multiples of 256 (fills the 256-wide MXU on v6e/v7x), then 128,
    # then 8; must divide the batch exactly.
    for align in (256, 128, 8):
        tm = (min(target, batch) // align) * align
        while tm >= align and batch % tm != 0:
            tm -= align
        if tm >= align:
            return tm
    return batch  # small / odd batch: single full-batch tile


def projection_mlp(x, w1, b1, gamma, beta, w2, b2, *, block_rows=256,
                   compute_dtype=jnp.bfloat16, vmem_limit_bytes=None):
    """Forward of ProjectionMLP (Linear -> BatchNorm1d(train) -> ReLU -> Linear).

    x: (B, Din); w1: (Din, H); b1/gamma/beta: (H,); w2: (H, Dout); b2: (Dout,).
    Weights are stored pre-transposed (in_features, out_features).
    block_rows ~256 is safe on all generations (raise to 512 on v5e/v6e).
    compute_dtype: dtype fed to the MXU (default bf16); stats/BN math are f32.
    """
    B = x.shape[0]
    Dout = w2.shape[1]
    out_dtype = x.dtype

    # Lane-dense padding of feature dims (no-op for 512/1024/256).
    x_p = _pad_axis(x, 1, 128).astype(compute_dtype)
    w1_p = _pad_axis(_pad_axis(w1, 0, 128), 1, 128).astype(compute_dtype)
    w2_p = _pad_axis(_pad_axis(w2, 0, 128), 1, 128).astype(compute_dtype)
    b1_p = _pad_axis(jnp.reshape(b1, (1, -1)), 1, 128).astype(jnp.float32)
    g_p = _pad_axis(jnp.reshape(gamma, (1, -1)), 1, 128).astype(jnp.float32)
    be_p = _pad_axis(jnp.reshape(beta, (1, -1)), 1, 128).astype(jnp.float32)
    b2_p = _pad_axis(jnp.reshape(b2, (1, -1)), 1, 128).astype(jnp.float32)

    Din_p = x_p.shape[1]
    H_p = w1_p.shape[1]
    Dout_p = w2_p.shape[1]

    tm = _pick_batch_tile(B, block_rows)
    n_tiles = B // tm

    # h scratch: f32 when small, bf16 otherwise (fits v7x 64 MiB VMEM).
    h_dtype = jnp.float32 if B * H_p * 4 <= (8 << 20) else jnp.bfloat16

    if vmem_limit_bytes is None:
        cs = jnp.dtype(compute_dtype).itemsize
        os_ = jnp.dtype(out_dtype).itemsize
        hs = jnp.dtype(h_dtype).itemsize
        est = (2 * tm * Din_p * cs          # streaming x tile (double buffered)
               + 2 * Din_p * H_p * cs       # resident w1
               + 2 * H_p * Dout_p * cs      # resident w2
               + 2 * tm * Dout_p * os_      # streaming out tile
               + 2 * 6 * max(H_p, Dout_p) * 4  # 1-row bias/gamma/beta blocks
               + B * H_p * hs               # persistent h scratch
               + 4 * H_p * 4)               # sum/sumsq/scale/shift
        vmem_limit_bytes = min(max(int(est * 1.4) + (4 << 20), 32 << 20),
                               96 << 20)

    out = pl.pallas_call(
        functools.partial(_projection_mlp_kernel, inv_n=1.0 / B),
        out_shape=jax.ShapeDtypeStruct((B, Dout_p), out_dtype),
        grid_spec=pltpu.PrefetchScalarGridSpec(
            num_scalar_prefetch=0,
            grid=(2, n_tiles),
            in_specs=[
                # x only needed in phase 0; phase 1 pins block 0 (no re-DMA).
                pl.BlockSpec((tm, Din_p), lambda p, i: (i * (1 - p), 0)),
                pl.BlockSpec((Din_p, H_p), lambda p, i: (0, 0)),   # w1
                pl.BlockSpec((1, H_p), lambda p, i: (0, 0)),       # b1
                pl.BlockSpec((1, H_p), lambda p, i: (0, 0)),       # gamma
                pl.BlockSpec((1, H_p), lambda p, i: (0, 0)),       # beta
                pl.BlockSpec((H_p, Dout_p), lambda p, i: (0, 0)),  # w2
                pl.BlockSpec((1, Dout_p), lambda p, i: (0, 0)),    # b2
            ],
            # Output only written in phase 1; phase 0 pins block 0 so no
            # garbage block is ever flushed to HBM.
            out_specs=pl.BlockSpec((tm, Dout_p), lambda p, i: (i * p, 0)),
            scratch_shapes=[
                pltpu.VMEM((n_tiles, tm, H_p), h_dtype),   # whole h, resident
                pltpu.VMEM((1, H_p), jnp.float32),         # sum
                pltpu.VMEM((1, H_p), jnp.float32),         # sumsq
                pltpu.VMEM((1, H_p), jnp.float32),         # BN scale
                pltpu.VMEM((1, H_p), jnp.float32),         # BN shift
            ]),
        compiler_params=pltpu.CompilerParams(
            dimension_semantics=("arbitrary", "arbitrary"),
            vmem_limit_bytes=int(vmem_limit_bytes)),
    )(x_p, w1_p, b1_p, g_p, be_p, w2_p, b2_p)

    if Dout_p != Dout:
        out = out[:, :Dout]
    return out


def reference_mlp(x, w1, b1, gamma, beta, w2, b2):
    hi = jax.lax.Precision.HIGHEST
    h = jnp.dot(x, w1, precision=hi) + jnp.reshape(b1, (1, -1))
    mean = jnp.mean(h, axis=0, keepdims=True)
    var = jnp.mean((h - mean) ** 2, axis=0, keepdims=True)
    h = (h - mean) / jnp.sqrt(var + BN_EPS)
    h = h * jnp.reshape(gamma, (1, -1)) + jnp.reshape(beta, (1, -1))
    h = jnp.maximum(h, 0.0)
    return jnp.dot(h, w2, precision=hi) + jnp.reshape(b2, (1, -1))


if __name__ == "__main__":
    # Small, lane-dense shapes consistent with the module
    # (real projector is 512 -> 1024 -> 256; all multiples of 128).
    B, D_IN, D_HID, D_OUT = 64, 128, 256, 128

    key = jax.random.PRNGKey(0)
    kx, kw1, kb1, kw2, kb2 = jax.random.split(key, 5)

    x = jax.random.normal(kx, (B, D_IN), dtype=jnp.float32)

    bound1 = 1.0 / (D_IN ** 0.5)
    w1 = jax.random.uniform(kw1, (D_IN, D_HID), minval=-bound1, maxval=bound1,
                            dtype=jnp.float32)
    b1 = jax.random.uniform(kb1, (D_HID,), minval=-bound1, maxval=bound1,
                            dtype=jnp.float32)
    gamma = jnp.ones((D_HID,), dtype=jnp.float32)   # BatchNorm1d weight
    beta = jnp.zeros((D_HID,), dtype=jnp.float32)   # BatchNorm1d bias
    bound2 = 1.0 / (D_HID ** 0.5)
    w2 = jax.random.uniform(kw2, (D_HID, D_OUT), minval=-bound2, maxval=bound2,
                            dtype=jnp.float32)
    b2 = jax.random.uniform(kb2, (D_OUT,), minval=-bound2, maxval=bound2,
                            dtype=jnp.float32)

    ref = reference_mlp(x, w1, b1, gamma, beta, w2, b2)

    # 1) f32 compute path; block_rows=16 -> 4 batch tiles (exercises the
    #    cross-tile BN accumulation and the phase split).
    out_f32 = projection_mlp(x, w1, b1, gamma, beta, w2, b2,
                             block_rows=16, compute_dtype=jnp.float32)
    out_f32 = jax.block_until_ready(out_f32)
    assert out_f32.shape == (B, D_OUT)
    assert jnp.allclose(out_f32, ref, atol=1e-3, rtol=1e-3), (
        float(jnp.max(jnp.abs(out_f32 - ref))))

    # 2) default bf16 compute path (MXU peak); looser tolerance.
    out_bf16 = projection_mlp(x, w1, b1, gamma, beta, w2, b2, block_rows=16)
    out_bf16 = jax.block_until_ready(out_bf16)
    assert out_bf16.dtype == x.dtype
    assert jnp.allclose(out_bf16, ref, atol=5e-2, rtol=5e-2), (
        float(jnp.max(jnp.abs(out_bf16 - ref))))

    # 3) non-128-aligned feature dims exercise the padding path.
    x2 = x[:24, :96]
    out2 = projection_mlp(x2, w1[:96, :160], b1[:160], gamma[:160],
                          beta[:160], w2[:160, :48], b2[:48],
                          block_rows=16, compute_dtype=jnp.float32)
    out2 = jax.block_until_ready(out2)
    ref2 = reference_mlp(x2, w1[:96, :160], b1[:160], gamma[:160],
                         beta[:160], w2[:160, :48], b2[:48])
    assert out2.shape == (24, 48)
    assert jnp.allclose(out2, ref2, atol=1e-3, rtol=1e-3), (
        float(jnp.max(jnp.abs(out2 - ref2))))

    print("KERNEL_OK")
</pallas_src>

<mosaic_0001>
module attributes {stable_mosaic.version = 11 : i64} {
  func.func @_projection_mlp_kernel(%arg0: i32, %arg1: i32, %arg2: memref<16x128xf32, #tpu.memory_space<vmem>>, %arg3: memref<128x256xf32, #tpu.memory_space<vmem>>, %arg4: memref<1x256xf32, #tpu.memory_space<vmem>>, %arg5: memref<1x256xf32, #tpu.memory_space<vmem>>, %arg6: memref<1x256xf32, #tpu.memory_space<vmem>>, %arg7: memref<256x128xf32, #tpu.memory_space<vmem>>, %arg8: memref<1x128xf32, #tpu.memory_space<vmem>>, %arg9: memref<16x128xf32, #tpu.memory_space<vmem>>, %arg10: memref<4x16x256xf32, #tpu.memory_space<vmem>>, %arg11: memref<1x256xf32, #tpu.memory_space<vmem>>, %arg12: memref<1x256xf32, #tpu.memory_space<vmem>>, %arg13: memref<1x256xf32, #tpu.memory_space<vmem>>, %arg14: memref<1x256xf32, #tpu.memory_space<vmem>>) attributes {dimension_semantics = [#tpu.dimension_semantics<arbitrary>, #tpu.dimension_semantics<arbitrary>], iteration_bounds = array<i64: 2, 4>, scalar_prefetch = 0 : i64, scratch_operands = 5 : i64, tpu.core_type = #tpu.core_type<tc>, window_params = [{transform_indices = @transform_0, window_bounds = array<i64: 16, 128>}, {pipeline_mode = #tpu.pipeline_mode<synchronous>, transform_indices = @transform_1, window_bounds = array<i64: 128, 256>}, {pipeline_mode = #tpu.pipeline_mode<synchronous>, transform_indices = @transform_2, window_bounds = array<i64: 1, 256>}, {pipeline_mode = #tpu.pipeline_mode<synchronous>, transform_indices = @transform_3, window_bounds = array<i64: 1, 256>}, {pipeline_mode = #tpu.pipeline_mode<synchronous>, transform_indices = @transform_4, window_bounds = array<i64: 1, 256>}, {pipeline_mode = #tpu.pipeline_mode<synchronous>, transform_indices = @transform_5, window_bounds = array<i64: 256, 128>}, {pipeline_mode = #tpu.pipeline_mode<synchronous>, transform_indices = @transform_6, window_bounds = array<i64: 1, 128>}, {transform_indices = @transform_7, window_bounds = array<i64: 16, 128>}]} {
    %c0_i32 = arith.constant 0 : i32
    %0 = arith.cmpi eq, %arg0, %c0_i32 : i32
    %c0_i32_0 = arith.constant 0 : i32
    %1 = arith.cmpi eq, %arg1, %c0_i32_0 : i32
    %2 = arith.andi %0, %1 : i1
    %3 = arith.extui %2 : i1 to i32
    %c0_i32_1 = arith.constant 0 : i32
    %4 = arith.cmpi ne, %3, %c0_i32_1 : i32
    scf.if %4 {
      %cst = arith.constant 0.000000e+00 : f32
      %16 = vector.broadcast %cst : f32 to vector<1x256xf32>
      %c0 = arith.constant 0 : index
      %c0_8 = arith.constant 0 : index
      %17 = vector.load %arg11[%c0, %c0_8] : memref<1x256xf32, #tpu.memory_space<vmem>>, vector<1x256xf32>
      tpu.vector_store %arg11[%c0, %c0_8], %16 {strides = array<i32>} : memref<1x256xf32, #tpu.memory_space<vmem>>, vector<1x256xf32>,
      %cst_9 = arith.constant 0.000000e+00 : f32
      %18 = vector.broadcast %cst_9 : f32 to vector<1x256xf32>
      %c0_10 = arith.constant 0 : index
      %c0_11 = arith.constant 0 : index
      %19 = vector.load %arg12[%c0_10, %c0_11] : memref<1x256xf32, #tpu.memory_space<vmem>>, vector<1x256xf32>
      tpu.vector_store %arg12[%c0_10, %c0_11], %18 {strides = array<i32>} : memref<1x256xf32, #tpu.memory_space<vmem>>, vector<1x256xf32>,
    } else {
    }
    %c0_i32_2 = arith.constant 0 : i32
    %5 = arith.cmpi eq, %arg0, %c0_i32_2 : i32
    %6 = arith.extui %5 : i1 to i32
    %c0_i32_3 = arith.constant 0 : i32
    %7 = arith.cmpi ne, %6, %c0_i32_3 : i32
    scf.if %7 {
      %c0 = arith.constant 0 : index
      %c0_8 = arith.constant 0 : index
      %16 = vector.load %arg2[%c0, %c0_8] : memref<16x128xf32, #tpu.memory_space<vmem>>, vector<16x128xf32>
      %c0_9 = arith.constant 0 : index
      %c0_10 = arith.constant 0 : index
      %17 = vector.load %arg3[%c0_9, %c0_10] : memref<128x256xf32, #tpu.memory_space<vmem>>, vector<128x256xf32>
      %cst = arith.constant dense<0.000000e+00> : vector<16x256xf32>
      %18 = tpu.matmul %16, %17, %cst {dimension_numbers = #tpu.dot_dimension_numbers<[1], [0], [0], [1], [0, 0, 1, 1], [], []>} : vector<16x128xf32>, vector<128x256xf32>, vector<16x256xf32> -> vector<16x256xf32>
      %c0_11 = arith.constant 0 : index
      %c0_12 = arith.constant 0 : index
      %19 = vector.load %arg4[%c0_11, %c0_12] : memref<1x256xf32, #tpu.memory_space<vmem>>, vector<1x256xf32>
      %20 = vector.broadcast %19 : vector<1x256xf32> to vector<16x256xf32>
      %21 = arith.addf %18, %20 : vector<16x256xf32>
      %22 = arith.index_cast %arg1 : i32 to index
      %c0_13 = arith.constant 0 : index
      %c0_14 = arith.constant 0 : index
      %23 = vector.load %arg10[%22, %c0_13, %c0_14] : memref<4x16x256xf32, #tpu.memory_space<vmem>>, vector<1x16x256xf32>
      %24 = vector.shape_cast %23 : vector<1x16x256xf32> to vector<16x256xf32>
      %25 = vector.shape_cast %21 : vector<16x256xf32> to vector<1x16x256xf32>
      tpu.vector_store %arg10[%22, %c0_13, %c0_14], %25 {strides = array<i32>} : memref<4x16x256xf32, #tpu.memory_space<vmem>>, vector<1x16x256xf32>,
      %c0_15 = arith.constant 0 : index
      %c0_16 = arith.constant 0 : index
      %26 = vector.load %arg11[%c0_15, %c0_16] : memref<1x256xf32, #tpu.memory_space<vmem>>, vector<1x256xf32>
      %cst_17 = arith.constant dense<0.000000e+00> : vector<256xf32>
      %27 = vector.multi_reduction <add>, %21, %cst_17 [0] : vector<16x256xf32> to vector<256xf32>
      %28 = vector.shape_cast %27 : vector<256xf32> to vector<1x256xf32>
      %29 = arith.addf %26, %28 : vector<1x256xf32>
      %c0_18 = arith.constant 0 : index
      %c0_19 = arith.constant 0 : index
      %30 = vector.load %arg11[%c0_18, %c0_19] : memref<1x256xf32, #tpu.memory_space<vmem>>, vector<1x256xf32>
      tpu.vector_store %arg11[%c0_18, %c0_19], %29 {strides = array<i32>} : memref<1x256xf32, #tpu.memory_space<vmem>>, vector<1x256xf32>,
      %c0_20 = arith.constant 0 : index
      %c0_21 = arith.constant 0 : index
      %31 = vector.load %arg12[%c0_20, %c0_21] : memref<1x256xf32, #tpu.memory_space<vmem>>, vector<1x256xf32>
      %32 = arith.mulf %21, %21 : vector<16x256xf32>
      %cst_22 = arith.constant dense<0.000000e+00> : vector<256xf32>
      %33 = vector.multi_reduction <add>, %32, %cst_22 [0] : vector<16x256xf32> to vector<256xf32>
      %34 = vector.shape_cast %33 : vector<256xf32> to vector<1x256xf32>
      %35 = arith.addf %31, %34 : vector<1x256xf32>
      %c0_23 = arith.constant 0 : index
      %c0_24 = arith.constant 0 : index
      %36 = vector.load %arg12[%c0_23, %c0_24] : memref<1x256xf32, #tpu.memory_space<vmem>>, vector<1x256xf32>
      tpu.vector_store %arg12[%c0_23, %c0_24], %35 {strides = array<i32>} : memref<1x256xf32, #tpu.memory_space<vmem>>, vector<1x256xf32>,
    } else {
    }
    %c1_i32 = arith.constant 1 : i32
    %8 = arith.cmpi eq, %arg0, %c1_i32 : i32
    %c0_i32_4 = arith.constant 0 : i32
    %9 = arith.cmpi eq, %arg1, %c0_i32_4 : i32
    %10 = arith.andi %8, %9 : i1
    %11 = arith.extui %10 : i1 to i32
    %c0_i32_5 = arith.constant 0 : i32
    %12 = arith.cmpi ne, %11, %c0_i32_5 : i32
    scf.if %12 {
      %c0 = arith.constant 0 : index
      %c0_8 = arith.constant 0 : index
      %16 = vector.load %arg11[%c0, %c0_8] : memref<1x256xf32, #tpu.memory_space<vmem>>, vector<1x256xf32>
      %cst = arith.constant 1.562500e-02 : f32
      %17 = vector.broadcast %cst : f32 to vector<1x256xf32>
      %18 = arith.mulf %16, %17 : vector<1x256xf32>
      %c0_9 = arith.constant 0 : index
      %c0_10 = arith.constant 0 : index
      %19 = vector.load %arg12[%c0_9, %c0_10] : memref<1x256xf32, #tpu.memory_space<vmem>>, vector<1x256xf32>
      %cst_11 = arith.constant 1.562500e-02 : f32
      %20 = vector.broadcast %cst_11 : f32 to vector<1x256xf32>
      %21 = arith.mulf %19, %20 : vector<1x256xf32>
      %22 = arith.mulf %18, %18 : vector<1x256xf32>
      %23 = arith.subf %21, %22 : vector<1x256xf32>
      %cst_12 = arith.constant 0.000000e+00 : f32
      %24 = vector.broadcast %cst_12 : f32 to vector<1x256xf32>
      %25 = arith.maximumf %23, %24 : vector<1x256xf32>
      %cst_13 = arith.constant 9.99999974E-6 : f32
      %26 = vector.broadcast %cst_13 : f32 to vector<1x256xf32>
      %27 = arith.addf %25, %26 : vector<1x256xf32>
      %28 = math.rsqrt %27 : vector<1x256xf32>
      %c0_14 = arith.constant 0 : index
      %c0_15 = arith.constant 0 : index
      %29 = vector.load %arg5[%c0_14, %c0_15] : memref<1x256xf32, #tpu.memory_space<vmem>>, vector<1x256xf32>
      %30 = arith.mulf %29, %28 : vector<1x256xf32>
      %c0_16 = arith.constant 0 : index
      %c0_17 = arith.constant 0 : index
      %31 = vector.load %arg13[%c0_16, %c0_17] : memref<1x256xf32, #tpu.memory_space<vmem>>, vector<1x256xf32>
      tpu.vector_store %arg13[%c0_16, %c0_17], %30 {strides = array<i32>} : memref<1x256xf32, #tpu.memory_space<vmem>>, vector<1x256xf32>,
      %c0_18 = arith.constant 0 : index
      %c0_19 = arith.constant 0 : index
      %32 = vector.load %arg6[%c0_18, %c0_19] : memref<1x256xf32, #tpu.memory_space<vmem>>, vector<1x256xf32>
      %33 = arith.mulf %18, %30 : vector<1x256xf32>
      %34 = arith.subf %32, %33 : vector<1x256xf32>
      %c0_20 = arith.constant 0 : index
      %c0_21 = arith.constant 0 : index
      %35 = vector.load %arg14[%c0_20, %c0_21] : memref<1x256xf32, #tpu.memory_space<vmem>>, vector<1x256xf32>
      tpu.vector_store %arg14[%c0_20, %c0_21], %34 {strides = array<i32>} : memref<1x256xf32, #tpu.memory_space<vmem>>, vector<1x256xf32>,
    } else {
    }
    %c1_i32_6 = arith.constant 1 : i32
    %13 = arith.cmpi eq, %arg0, %c1_i32_6 : i32
    %14 = arith.extui %13 : i1 to i32
    %c0_i32_7 = arith.constant 0 : i32
    %15 = arith.cmpi ne, %14, %c0_i32_7 : i32
    scf.if %15 {
      %16 = arith.index_cast %arg1 : i32 to index
      %c0 = arith.constant 0 : index
      %c0_8 = arith.constant 0 : index
      %17 = vector.load %arg10[%16, %c0, %c0_8] : memref<4x16x256xf32, #tpu.memory_space<vmem>>, vector<1x16x256xf32>
      %18 = vector.shape_cast %17 : vector<1x16x256xf32> to vector<16x256xf32>
      %c0_9 = arith.constant 0 : index
      %c0_10 = arith.constant 0 : index
      %19 = vector.load %arg13[%c0_9, %c0_10] : memref<1x256xf32, #tpu.memory_space<vmem>>, vector<1x256xf32>
      %20 = vector.broadcast %19 : vector<1x256xf32> to vector<16x256xf32>
      %21 = arith.mulf %18, %20 : vector<16x256xf32>
      %c0_11 = arith.constant 0 : index
      %c0_12 = arith.constant 0 : index
      %22 = vector.load %arg14[%c0_11, %c0_12] : memref<1x256xf32, #tpu.memory_space<vmem>>, vector<1x256xf32>
      %23 = vector.broadcast %22 : vector<1x256xf32> to vector<16x256xf32>
      %24 = arith.addf %21, %23 : vector<16x256xf32>
      %cst = arith.constant 0.000000e+00 : f32
      %25 = vector.broadcast %cst : f32 to vector<16x256xf32>
      %26 = arith.maximumf %24, %25 : vector<16x256xf32>
      %c0_13 = arith.constant 0 : index
      %c0_14 = arith.constant 0 : index
      %27 = vector.load %arg7[%c0_13, %c0_14] : memref<256x128xf32, #tpu.memory_space<vmem>>, vector<256x128xf32>
      %cst_15 = arith.constant dense<0.000000e+00> : vector<16x128xf32>
      %28 = tpu.matmul %26, %27, %cst_15 {dimension_numbers = #tpu.dot_dimension_numbers<[1], [0], [0], [1], [0, 0, 1, 1], [], []>} : vector<16x256xf32>, vector<256x128xf32>, vector<16x128xf32> -> vector<16x128xf32>
      %c0_16 = arith.constant 0 : index
      %c0_17 = arith.constant 0 : index
      %29 = vector.load %arg8[%c0_16, %c0_17] : memref<1x128xf32, #tpu.memory_space<vmem>>, vector<1x128xf32>
      %30 = vector.broadcast %29 : vector<1x128xf32> to vector<16x128xf32>
      %31 = arith.addf %28, %30 : vector<16x128xf32>
      %c0_18 = arith.constant 0 : index
      %c0_19 = arith.constant 0 : index
      %32 = vector.load %arg9[%c0_18, %c0_19] : memref<16x128xf32, #tpu.memory_space<vmem>>, vector<16x128xf32>
      tpu.vector_store %arg9[%c0_18, %c0_19], %31 {strides = array<i32>} : memref<16x128xf32, #tpu.memory_space<vmem>>, vector<16x128xf32>,
    } else {
    }
    return
  }
  func.func @transform_0(%arg0: i32, %arg1: i32) -> (i32, i32) {
    %c1_i32 = arith.constant 1 : i32
    %0 = arith.subi %c1_i32, %arg0 : i32
    %1 = arith.muli %arg1, %0 : i32
    %c0_i32 = arith.constant 0 : i32
    %c0_i32_0 = arith.constant 0 : i32
    return %1, %c0_i32 : i32, i32
  }
  func.func @transform_1(%arg0: i32, %arg1: i32) -> (i32, i32) {
    %c0_i32 = arith.constant 0 : i32
    %c0_i32_0 = arith.constant 0 : i32
    %c0_i32_1 = arith.constant 0 : i32
    return %c0_i32, %c0_i32_0 : i32, i32
  }
  func.func @transform_2(%arg0: i32, %arg1: i32) -> (i32, i32) {
    %c0_i32 = arith.constant 0 : i32
    %c0_i32_0 = arith.constant 0 : i32
    %c0_i32_1 = arith.constant 0 : i32
    return %c0_i32, %c0_i32_0 : i32, i32
  }
  func.func @transform_3(%arg0: i32, %arg1: i32) -> (i32, i32) {
    %c0_i32 = arith.constant 0 : i32
    %c0_i32_0 = arith.constant 0 : i32
    %c0_i32_1 = arith.constant 0 : i32
    return %c0_i32, %c0_i32_0 : i32, i32
  }
  func.func @transform_4(%arg0: i32, %arg1: i32) -> (i32, i32) {
    %c0_i32 = arith.constant 0 : i32
    %c0_i32_0 = arith.constant 0 : i32
    %c0_i32_1 = arith.constant 0 : i32
    return %c0_i32, %c0_i32_0 : i32, i32
  }
  func.func @transform_5(%arg0: i32, %arg1: i32) -> (i32, i32) {
    %c0_i32 = arith.constant 0 : i32
    %c0_i32_0 = arith.constant 0 : i32
    %c0_i32_1 = arith.constant 0 : i32
    return %c0_i32, %c0_i32_0 : i32, i32
  }
  func.func @transform_6(%arg0: i32, %arg1: i32) -> (i32, i32) {
    %c0_i32 = arith.constant 0 : i32
    %c0_i32_0 = arith.constant 0 : i32
    %c0_i32_1 = arith.constant 0 : i32
    return %c0_i32, %c0_i32_0 : i32, i32
  }
  func.func @transform_7(%arg0: i32, %arg1: i32) -> (i32, i32) {
    %0 = arith.muli %arg1, %arg0 : i32
    %c0_i32 = arith.constant 0 : i32
    %c0_i32_0 = arith.constant 0 : i32
    return %0, %c0_i32 : i32, i32
  }
}

</mosaic_0001>

<llo_original>
// kernel: tpu_custom_call.1
$region0: #{tpu_custom_call.1}
  #allocation0 [shape = 'u32[]', space=smem, size = 0x4, offset = 0x4, fixed_abs, tag = 'smem constant byte address 0x4 - core index']
  #allocation1 [shape = 'u32[144,128]{1,0:T(1,128)}', space=vmem, size = 0x12000, scoped, tag = 'internal scratch']
  #allocation2 [shape = 'f32[4,16,256]{2,1,0:T(8,128)}', space=vmem, size = 0x10000, scoped, tag = 'scratch operand']
  #allocation3 [shape = 'f32[1,256]{1,0:T(1,128)}', space=vmem, size = 0x400, scoped, tag = 'scratch operand']
  #allocation4 [shape = 'f32[1,256]{1,0:T(1,128)}', space=vmem, size = 0x400, scoped, tag = 'scratch operand']
  #allocation5 [shape = 'f32[1,256]{1,0:T(1,128)}', space=vmem, size = 0x400, scoped, tag = 'scratch operand']
  #allocation6 [shape = 'f32[1,256]{1,0:T(1,128)}', space=vmem, size = 0x400, scoped, tag = 'scratch operand']
  %s0 = inlined_call_operand.hbm [shape: f32[64,128], index: 0, kind: input, shape index: {}]
  %s1 = inlined_call_operand.hbm [shape: f32[128,256], index: 1, kind: input, shape index: {}]
  %s2 = inlined_call_operand.vmem [shape: f32[1,256], index: 2, kind: input, shape index: {}]
  %s3 = inlined_call_operand.vmem [shape: f32[1,256], index: 3, kind: input, shape index: {}]
  %s4 = inlined_call_operand.vmem [shape: f32[1,256], index: 4, kind: input, shape index: {}]
  %s5 = inlined_call_operand.hbm [shape: f32[256,128], index: 5, kind: input, shape index: {}]
  %s6 = inlined_call_operand.vmem [shape: f32[1,128], index: 6, kind: input, shape index: {}]
  %s7 = inlined_call_operand.hbm [shape: f32[64,128], index: 7, kind: output, shape index: {}]
  %s8 = sld [smem:[#allocation0]]
  $region89: #{tpu_custom_call.1} parent=0
    _
  %s10 = ssub.s32 1, %s8
  %s11 = scalar_select 0, %s10, %s8
  $region1: #{tpu_custom_call.1} parent=0
    #allocation7 [shape = 'u8[16384]{0}', space=vmem, size = 0x4000, scoped, tag = 'input window, operand 0']
    #allocation8 [shape = 's32[2]{0}', space=sflag, size = 0x8, scoped, tag = 'scoped memory for tpu_custom_call.1']
    #allocation9 [shape = 's32[2]{0}', space=sflag, size = 0x8, scoped, tag = 'scoped memory for tpu_custom_call.1']
    #allocation10 [shape = 'u8[131072]{0}', space=vmem, size = 0x20000, scoped, tag = 'input window, operand 1, single buffered']
    #allocation11 [shape = 's32[1]{0}', space=sflag, size = 0x4, scoped, tag = 'scoped memory for tpu_custom_call.1']
    #allocation12 [shape = 'u8[131072]{0}', space=vmem, size = 0x20000, scoped, tag = 'input window, operand 5, single buffered']
    #allocation13 [shape = 'u8[16384]{0}', space=vmem, size = 0x4000, scoped, tag = 'output window, operand 0']
    %12 = vsyncpa [#allocation8], 0
    %s13 = scalar_lea.sflag [#allocation8], 1
    %14 = vsyncpa %s13, 0
    %15 = vsyncpa [#allocation11], 0
    %16 = vsyncpa [#allocation9], 0
    %s17 = scalar_lea.sflag [#allocation9], 1
    %18 = vsyncpa %s17, 0
    loop: start=0, step=1, limit=10
    $region2: #{tpu_custom_call.1} parent=1 // loop_pre_header
      _
    $region3: #{tpu_custom_call.1} parent=1 // loop_header
      %s20 = sphi 0, %s24
      %p21 = scmp.ge.s32.totalorder %s20, 10
      %s27 = sphi 0, %s39
      %s28 = sphi 0, %s35
      %s29 = sphi 0, %s27
      %s30 = sphi 0, %s28
      %s31 = sphi 0, %s29
      %s32 = sphi 0, %s30
      %s46 = sphi 0, %s48
      %s49 = sphi 0, %s46
      %s50 = sphi 0, %s49
      %s66 = sphi 0, %s50
      %s70 = sphi 0, %s70
      %s72 = sphi 0, %s70
      %s73 = sphi 0, %s72
      %s87 = sphi 0, %s73
      %s91 = sphi 0, %s91
      %s93 = sphi 0, %s91
      %s94 = sphi 0, %s93
      %s108 = sphi 0, %s94
      %s112 = sphi 0, %s112
      %s114 = sphi 0, %s112
      %s115 = sphi 0, %s114
      %s129 = sphi 0, %s115
      %s133 = sphi 0, %s133
      %s135 = sphi 0, %s133
      %s136 = sphi 0, %s135
      %s150 = sphi 0, %s136
      %s154 = sphi 0, %s154
      %s156 = sphi 0, %s154
      %s157 = sphi 0, %s156
      %s171 = sphi 0, %s157
      %s175 = sphi 0, %s175
      %s177 = sphi 0, %s175
      %s178 = sphi 0, %s177
      %s192 = sphi 0, %s178
      %s200 = sphi 0, %s202
      %s203 = sphi 0, %s200
      %s204 = sphi 0, %s203
      %s220 = sphi 0, %s204
    $region4: #{tpu_custom_call.1} parent=1 // loop_header_branch
      %23 = sbr.rel (%p21) target = $region8
    $region5: #{tpu_custom_call.1} parent=1 // loop_body
      %s25 = ssub.s32 %s20, 1
      %s26 = ssub.s32 %s20, 2
      %s33 = sadd.s32 1, %s28
      %p34 = scmp.ge.s32.totalorder %s33, 4
      %s35 = scalar_select %p34, 0, %s33
      %s36 = sadd.s32 1, %s27
      %s37 = scalar_select %p34, %s36, %s27
      %p38 = scmp.ge.s32.totalorder %s37, 2
      %s39 = scalar_select %p38, 0, %s37
      %s40 = ssub.s32 1, %s27
      %s41 = smul.u32 %s28, %s40
      %s42 = ssub.s32 1, %s39
      %s43 = smul.u32 %s35, %s42
      %s44 = ssub.s32 %s41, %s43
      %p45 = scmp.eq.s32.totalorder %s44, 0
      %s47 = sadd.s32 %s46, 1
      %s48 = scalar_select %p45, %s46, %s47
      %p51 = pneg %p45
      %p52 = scmp.eq.s32.totalorder %s20, 7
      %p53 = por %p51, %p52
      %p54 = scmp.ne.s32.totalorder %s46, %s49
      %p55 = scmp.eq.s32.totalorder %s20, 0
      %p56 = por %p54, %p55
      %p57 = scmp.ne.s32.totalorder %s46, %s49
      %p58 = scmp.eq.s32.totalorder %s25, 7
      %p59 = por %p57, %p58
      %p60 = scmp.ne.s32.totalorder %s49, %s50
      %p61 = scmp.eq.s32.totalorder %s25, 0
      %p62 = por %p60, %p61
      %p63 = scmp.ne.s32.totalorder %s49, %s50
      %p64 = scmp.eq.s32.totalorder %s26, 7
      %p65 = por %p63, %p64
      %p67 = scmp.ne.s32.totalorder %s50, %s66
      %p68 = scmp.eq.s32.totalorder %s26, 0
      %p69 = por %p67, %p68
      %s71 = sadd.s32 %s70, 1
      %p74 = scmp.eq.s32.totalorder %s20, 7
      %p75 = scmp.ne.s32.totalorder %s70, %s72
      %p76 = scmp.eq.s32.totalorder %s20, 0
      %p77 = por %p75, %p76
      %p78 = scmp.ne.s32.totalorder %s70, %s72
      %p79 = scmp.eq.s32.totalorder %s25, 7
      %p80 = por %p78, %p79
      %p81 = scmp.ne.s32.totalorder %s72, %s73
      %p82 = scmp.eq.s32.totalorder %s25, 0
      %p83 = por %p81, %p82
      %p84 = scmp.ne.s32.totalorder %s72, %s73
      %p85 = scmp.eq.s32.totalorder %s26, 7
      %p86 = por %p84, %p85
      %p88 = scmp.ne.s32.totalorder %s73, %s87
      %p89 = scmp.eq.s32.totalorder %s26, 0
      %p90 = por %p88, %p89
      %s92 = sadd.s32 %s91, 1
      %p95 = scmp.eq.s32.totalorder %s20, 7
      %p96 = scmp.ne.s32.totalorder %s91, %s93
      %p97 = scmp.eq.s32.totalorder %s20, 0
      %p98 = por %p96, %p97
      %p99 = scmp.ne.s32.totalorder %s91, %s93
      %p100 = scmp.eq.s32.totalorder %s25, 7
      %p101 = por %p99, %p100
      %p102 = scmp.ne.s32.totalorder %s93, %s94
      %p103 = scmp.eq.s32.totalorder %s25, 0
      %p104 = por %p102, %p103
      %p105 = scmp.ne.s32.totalorder %s93, %s94
      %p106 = scmp.eq.s32.totalorder %s26, 7
      %p107 = por %p105, %p106
      %p109 = scmp.ne.s32.totalorder %s94, %s108
      %p110 = scmp.eq.s32.totalorder %s26, 0
      %p111 = por %p109, %p110
      %s113 = sadd.s32 %s112, 1
      %p116 = scmp.eq.s32.totalorder %s20, 7
      %p117 = scmp.ne.s32.totalorder %s112, %s114
      %p118 = scmp.eq.s32.totalorder %s20, 0
      %p119 = por %p117, %p118
      %p120 = scmp.ne.s32.totalorder %s112, %s114
      %p121 = scmp.eq.s32.totalorder %s25, 7
      %p122 = por %p120, %p121
      %p123 = scmp.ne.s32.totalorder %s114, %s115
      %p124 = scmp.eq.s32.totalorder %s25, 0
      %p125 = por %p123, %p124
      %p126 = scmp.ne.s32.totalorder %s114, %s115
      %p127 = scmp.eq.s32.totalorder %s26, 7
      %p128 = por %p126, %p127
      %p130 = scmp.ne.s32.totalorder %s115, %s129
      %p131 = scmp.eq.s32.totalorder %s26, 0
      %p132 = por %p130, %p131
      %s134 = sadd.s32 %s133, 1
      %p137 = scmp.eq.s32.totalorder %s20, 7
      %p138 = scmp.ne.s32.totalorder %s133, %s135
      %p139 = scmp.eq.s32.totalorder %s20, 0
      %p140 = por %p138, %p139
      %p141 = scmp.ne.s32.totalorder %s133, %s135
      %p142 = scmp.eq.s32.totalorder %s25, 7
      %p143 = por %p141, %p142
      %p144 = scmp.ne.s32.totalorder %s135, %s136
      %p145 = scmp.eq.s32.totalorder %s25, 0
      %p146 = por %p144, %p145
      %p147 = scmp.ne.s32.totalorder %s135, %s136
      %p148 = scmp.eq.s32.totalorder %s26, 7
      %p149 = por %p147, %p148
      %p151 = scmp.ne.s32.totalorder %s136, %s150
      %p152 = scmp.eq.s32.totalorder %s26, 0
      %p153 = por %p151, %p152
      %s155 = sadd.s32 %s154, 1
      %p158 = scmp.eq.s32.totalorder %s20, 7
      %p159 = scmp.ne.s32.totalorder %s154, %s156
      %p160 = scmp.eq.s32.totalorder %s20, 0
      %p161 = por %p159, %p160
      %p162 = scmp.ne.s32.totalorder %s154, %s156
      %p163 = scmp.eq.s32.totalorder %s25, 7
      %p164 = por %p162, %p163
      %p165 = scmp.ne.s32.totalorder %s156, %s157
      %p166 = scmp.eq.s32.totalorder %s25, 0
      %p167 = por %p165, %p166
      %p168 = scmp.ne.s32.totalorder %s156, %s157
      %p169 = scmp.eq.s32.totalorder %s26, 7
      %p170 = por %p168, %p169
      %p172 = scmp.ne.s32.totalorder %s157, %s171
      %p173 = scmp.eq.s32.totalorder %s26, 0
      %p174 = por %p172, %p173
      %s176 = sadd.s32 %s175, 1
      %p179 = scmp.eq.s32.totalorder %s20, 7
      %p180 = scmp.ne.s32.totalorder %s175, %s177
      %p181 = scmp.eq.s32.totalorder %s20, 0
      %p182 = por %p180, %p181
      %p183 = scmp.ne.s32.totalorder %s175, %s177
      %p184 = scmp.eq.s32.totalorder %s25, 7
      %p185 = por %p183, %p184
      %p186 = scmp.ne.s32.totalorder %s177, %s178
      %p187 = scmp.eq.s32.totalorder %s25, 0
      %p188 = por %p186, %p187
      %p189 = scmp.ne.s32.totalorder %s177, %s178
      %p190 = scmp.eq.s32.totalorder %s26, 7
      %p191 = por %p189, %p190
      %p193 = scmp.ne.s32.totalorder %s178, %s192
      %p194 = scmp.eq.s32.totalorder %s26, 0
      %p195 = por %p193, %p194
      %s196 = smul.u32 %s28, %s27
      %s197 = smul.u32 %s35, %s39
      %s198 = ssub.s32 %s196, %s197
      %p199 = scmp.eq.s32.totalorder %s198, 0
      %s201 = sadd.s32 %s200, 1
      %s202 = scalar_select %p199, %s200, %s201
      %p205 = pneg %p199
      %p206 = scmp.eq.s32.totalorder %s20, 7
      %p207 = por %p205, %p206
      %p208 = scmp.ne.s32.totalorder %s200, %s203
      %p209 = scmp.eq.s32.totalorder %s20, 0
      %p210 = por %p208, %p209
      %p211 = scmp.ne.s32.totalorder %s200, %s203
      %p212 = scmp.eq.s32.totalorder %s25, 7
      %p213 = por %p211, %p212
      %p214 = scmp.ne.s32.totalorder %s203, %s204
      %p215 = scmp.eq.s32.totalorder %s25, 0
      %p216 = por %p214, %p215
      %p217 = scmp.ne.s32.totalorder %s203, %s204
      %p218 = scmp.eq.s32.totalorder %s26, 7
      %p219 = por %p217, %p218
      %p221 = scmp.ne.s32.totalorder %s204, %s220
      %p222 = scmp.eq.s32.totalorder %s26, 0
      %p223 = por %p221, %p222
      %p224 = scmp.le.s32.totalorder 1, %s20
      %p225 = scmp.lt.s32.totalorder %s20, 9
      %p226 = pnand %p224, %p225
      %p227 = pneg %p226
      // Predicated region
      $region9: #{tpu_custom_call.1} parent=5 // pred_check
        _
      $region10: #{tpu_custom_call.1} parent=5 // pred_check_branch
        %229 = sbr.rel (%p226) target = $region12
      $region11: #{tpu_custom_call.1} parent=5 // pred_region
        %s230 = ssub.s32 %s20, 1
        // Predicated region
        $region13: #{tpu_custom_call.1} parent=11 // pred_check
          %p231 = pneg %p83
        $region14: #{tpu_custom_call.1} parent=11 // pred_check_branch
          %233 = sbr.rel (%p231) target = $region16
        $region15: #{tpu_custom_call.1} parent=11 // pred_region
          %s235 = ssub.s32 4096, 4096
          %236 = vsyncadd [#allocation11], %s235
          %s237 = sshll.u32 [#allocation10], 4
          %s238 = int_to_ptr.vmem [resolvable:$true] %s237
          %243 = dma.hbm_to_vmem [thread:$0]  %s1, 4096, %s238, [#allocation11], 256, 256, 16
        $region16: #{tpu_custom_call.1} parent=11 // pred_fallthru
          _
        // Predicated region
        $region17: #{tpu_custom_call.1} parent=11 // pred_check
          %p244 = pneg %p104
        $region18: #{tpu_custom_call.1} parent=11 // pred_check_branch
          %246 = sbr.rel (%p244) target = $region20
        $region19: #{tpu_custom_call.1} parent=11 // pred_region
          _
        $region20: #{tpu_custom_call.1} parent=11 // pred_fallthru
          _
        // Predicated region
        $region21: #{tpu_custom_call.1} parent=11 // pred_check
          %p247 = pneg %p125
        $region22: #{tpu_custom_call.1} parent=11 // pred_check_branch
          %249 = sbr.rel (%p247) target = $region24
        $region23: #{tpu_custom_call.1} parent=11 // pred_region
          _
        $region24: #{tpu_custom_call.1} parent=11 // pred_fallthru
          _
        // Predicated region
        $region25: #{tpu_custom_call.1} parent=11 // pred_check
          %p250 = pneg %p146
        $region26: #{tpu_custom_call.1} parent=11 // pred_check_branch
          %252 = sbr.rel (%p250) target = $region28
        $region27: #{tpu_custom_call.1} parent=11 // pred_region
          _
        $region28: #{tpu_custom_call.1} parent=11 // pred_fallthru
          _
        // Predicated region
        $region29: #{tpu_custom_call.1} parent=11 // pred_check
          %p253 = pneg %p167
        $region30: #{tpu_custom_call.1} parent=11 // pred_check_branch
          %255 = sbr.rel (%p253) target = $region32
        $region31: #{tpu_custom_call.1} parent=11 // pred_region
          %s257 = ssub.s32 4096, 4096
          %258 = vsyncadd [#allocation11], %s257
          %s259 = sshll.u32 [#allocation12], 4
          %s260 = int_to_ptr.vmem [resolvable:$true] %s259
          %265 = dma.hbm_to_vmem [thread:$0]  %s5, 4096, %s260, [#allocation11], 128, 128, 8
        $region32: #{tpu_custom_call.1} parent=11 // pred_fallthru
          _
        // Predicated region
        $region33: #{tpu_custom_call.1} parent=11 // pred_check
          %p266 = pneg %p188
        $region34: #{tpu_custom_call.1} parent=11 // pred_check_branch
          %268 = sbr.rel (%p266) target = $region36
        $region35: #{tpu_custom_call.1} parent=11 // pred_region
          _
        $region36: #{tpu_custom_call.1} parent=11 // pred_fallthru
          _
      $region12: #{tpu_custom_call.1} parent=5 // pred_fallthru
        _
      %p269 = scmp.lt.s32.totalorder %s20, 8
      // Predicated region
      $region37: #{tpu_custom_call.1} parent=5 // pred_check
        %p270 = pneg %p269
      $region38: #{tpu_custom_call.1} parent=5 // pred_check_branch
        %272 = sbr.rel (%p270) target = $region40
      $region39: #{tpu_custom_call.1} parent=5 // pred_region
        // Predicated region
        $region41: #{tpu_custom_call.1} parent=39 // pred_check
          %p273 = pneg %p56
        $region42: #{tpu_custom_call.1} parent=39 // pred_check_branch
          %275 = sbr.rel (%p273) target = $region44
        $region43: #{tpu_custom_call.1} parent=39 // pred_region
          %s276 = sand.u32 %s46, 1
          %s277 = scalar_lea.sflag [#allocation8], %s276
          %s278 = sand.u32 %s46, 1
          %s279 = smul.addr %s278, 16
          %s280 = scalar_lea.vmem [#allocation7], %s279
          %s281 = ssub.s32 1, %s27
          %s282 = smul.u32 %s28, %s281
          %s283 = smul.u32 2, %s282
          %s285 = ssub.s32 256, 256
          %286 = vsyncadd %s277, %s285
          %s287 = smul.addr %s283, 128
          %s288 = scalar_lea.hbm %s0, %s287
          %s289 = sshll.u32 %s280, 4
          %s290 = int_to_ptr.vmem [resolvable:$true] %s289
          %295 = dma.hbm_to_vmem [thread:$0]  %s288, 256, %s290, %s277, 128, 128, 8
        $region44: #{tpu_custom_call.1} parent=39 // pred_fallthru
          _
      $region40: #{tpu_custom_call.1} parent=5 // pred_fallthru
        _
      %p296 = scmp.le.s32.totalorder 1, %s20
      %p297 = scmp.lt.s32.totalorder %s20, 9
      %p298 = pnand %p296, %p297
      %p299 = pneg %p298
      // Predicated region
      $region45: #{tpu_custom_call.1} parent=5 // pred_check
        _
      $region46: #{tpu_custom_call.1} parent=5 // pred_check_branch
        %301 = sbr.rel (%p298) target = $region48
      $region47: #{tpu_custom_call.1} parent=5 // pred_region
        %s302 = ssub.s32 %s20, 1
        %s303 = sand.u32 %s49, 1
        %s304 = scalar_lea.sflag [#allocation8], %s303
        %s305 = sand.u32 %s49, 1
        %s306 = smul.addr %s305, 16
        %s307 = scalar_lea.vmem [#allocation7], %s306
        // Predicated region
        $region49: #{tpu_custom_call.1} parent=47 // pred_check
          %p308 = pneg %p62
        $region50: #{tpu_custom_call.1} parent=47 // pred_check_branch
          %310 = sbr.rel (%p308) target = $region52
        $region51: #{tpu_custom_call.1} parent=47 // pred_region
          %311 = dma.done %s304, 256
        $region52: #{tpu_custom_call.1} parent=47 // pred_fallthru
          _
        // Predicated region
        $region53: #{tpu_custom_call.1} parent=47 // pred_check
          %p312 = pneg %p83
        $region54: #{tpu_custom_call.1} parent=47 // pred_check_branch
          %314 = sbr.rel (%p312) target = $region56
        $region55: #{tpu_custom_call.1} parent=47 // pred_region
          %315 = dma.done [#allocation11], 4096
        $region56: #{tpu_custom_call.1} parent=47 // pred_fallthru
          _
        // Predicated region
        $region57: #{tpu_custom_call.1} parent=47 // pred_check
          %p316 = pneg %p167
        $region58: #{tpu_custom_call.1} parent=47 // pred_check_branch
          %318 = sbr.rel (%p316) target = $region60
        $region59: #{tpu_custom_call.1} parent=47 // pred_region
          %319 = dma.done [#allocation11], 4096
        $region60: #{tpu_custom_call.1} parent=47 // pred_fallthru
          _
        %s320 = sand.u32 %s49, 1
        %s321 = scalar_lea.sflag [#allocation8], %s320
        %s322 = sand.u32 %s49, 1
        %s323 = smul.addr %s322, 16
        %s324 = scalar_lea.vmem [#allocation7], %s323
        %p325 = pneg %p62
        %p326 = pneg %p59
        %p327 = pneg %p83
        %p328 = pneg %p80
        %p329 = pneg %p104
        %p330 = pneg %p101
        %p331 = pneg %p125
        %p332 = pneg %p122
        %p333 = pneg %p146
        %p334 = pneg %p143
        %p335 = pneg %p167
        %p336 = pneg %p164
        %p337 = pneg %p188
        %p338 = pneg %p185
        %p339 = pneg %p216
        %p340 = pneg %p213
        %s341 = sand.u32 %s203, 1
        %s342 = scalar_lea.sflag [#allocation9], %s341
        %s343 = sand.u32 %s203, 1
        %s344 = smul.addr %s343, 16
        %s345 = scalar_lea.vmem [#allocation13], %s344
        %s346 = ssub.s32 1, %s29
        %s347 = smul.u32 %s30, %s346
        %s348 = smul.u32 2, %s347
        %s349 = smul.u32 %s30, %s29
        %s350 = smul.u32 2, %s349
        %p351 = scmp.eq.s32.totalorder %s29, 0
        %p352 = scmp.eq.s32.totalorder %s30, 0
        %p353 = pnand %p351, %p352
        %p354 = pneg %p353
        // Predicated region
        $region61: #{tpu_custom_call.1} parent=47 // pred_check
          _
        $region62: #{tpu_custom_call.1} parent=47 // pred_check_branch
          %356 = sbr.rel (%p353) target = $region64
        $region63: #{tpu_custom_call.1} parent=47 // pred_region
          %v357 = vlaneseq
          %vm358 = vcmp.ge.s32.totalorder %v357, 0
          %vm359 = vcmp.lt.s32.totalorder %v357, 256
          %vm360 = vmand %vm358, %vm359
          %361 = vst.msk [vmem:[#allocation3] sm:$0x3] %vm360, 0.0
          %362 = vst.msk [vmem:[#allocation4] sm:$0x3] %vm360, 0.0
        $region64: #{tpu_custom_call.1} parent=47 // pred_fallthru
          _
        // Predicated region
        $region65: #{tpu_custom_call.1} parent=47 // pred_check
          %p363 = pneg %p351
        $region66: #{tpu_custom_call.1} parent=47 // pred_check_branch
          %365 = sbr.rel (%p363) target = $region68
        $region67: #{tpu_custom_call.1} parent=47 // pred_region
          %v366 = vld [vmem:[%s307] sm:$0xff]
          %v367 = vld [vmem:[%s307 + $0x8] sm:$0xff]
          %v368 = vld [vmem:[#allocation10] sm:$0xff]
          %v369 = vld [vmem:[#allocation10 + $0x8] sm:$0xff]
          %v370 = vld [vmem:[#allocation10 + $0x10] sm:$0xff]
          %v371 = vld [vmem:[#allocation10 + $0x18] sm:$0xff]
          %v372 = vld [vmem:[#allocation10 + $0x20] sm:$0xff]
          %v373 = vld [vmem:[#allocation10 + $0x28] sm:$0xff]
          %v374 = vld [vmem:[#allocation10 + $0x30] sm:$0xff]
          %v375 = vld [vmem:[#allocation10 + $0x38] sm:$0xff]
          %v376 = vld [vmem:[#allocation10 + $0x40] sm:$0xff]
          %v377 = vld [vmem:[#allocation10 + $0x48] sm:$0xff]
          %v378 = vld [vmem:[#allocation10 + $0x50] sm:$0xff]
          %v379 = vld [vmem:[#allocation10 + $0x58] sm:$0xff]
          %v380 = vld [vmem:[#allocation10 + $0x60] sm:$0xff]
          %v381 = vld [vmem:[#allocation10 + $0x68] sm:$0xff]
          %v382 = vld [vmem:[#allocation10 + $0x70] sm:$0xff]
          %v383 = vld [vmem:[#allocation10 + $0x78] sm:$0xff]
          %v384 = vld [vmem:[#allocation10 + $0x80] sm:$0xff]
          %v385 = vld [vmem:[#allocation10 + $0x88] sm:$0xff]
          %v386 = vld [vmem:[#allocation10 + $0x90] sm:$0xff]
          %v387 = vld [vmem:[#allocation10 + $0x98] sm:$0xff]
          %v388 = vld [vmem:[#allocation10 + $0xa0] sm:$0xff]
          %v389 = vld [vmem:[#allocation10 + $0xa8] sm:$0xff]
          %v390 = vld [vmem:[#allocation10 + $0xb0] sm:$0xff]
          %v391 = vld [vmem:[#allocation10 + $0xb8] sm:$0xff]
          %v392 = vld [vmem:[#allocation10 + $0xc0] sm:$0xff]
          %v393 = vld [vmem:[#allocation10 + $0xc8] sm:$0xff]
          %v394 = vld [vmem:[#allocation10 + $0xd0] sm:$0xff]
          %v395 = vld [vmem:[#allocation10 + $0xd8] sm:$0xff]
          %v396 = vld [vmem:[#allocation10 + $0xe0] sm:$0xff]
          %v397 = vld [vmem:[#allocation10 + $0xe8] sm:$0xff]
          %v398 = vld [vmem:[#allocation10 + $0xf0] sm:$0xff]
          %v399 = vld [vmem:[#allocation10 + $0xf8] sm:$0xff]
          %v400 = vld [vmem:[%s2] sm:$0x3]
          %v402 = vlaneseq
          %v403 = vshrl.u32 %v402, 7
          %v404 = vsub.s32 0, %v403
          %v405 = vrot.slane %v400, %v404
          %v406 = vlaneseq
          %v407 = vshrl.u32 %v406, 7
          %v408 = vsub.s32 1, %v407
          %v409 = vrot.slane %v400, %v408
          %412 = vmatprep.subr.mxu0 %v369
          %413 = vmatpush1.msra.mxu0 %v368
          %414 = vmatprep.subr.mxu0 %v371
          %415 = vmatpush1.msra.mxu0 %v370
          %416 = vmatprep.subr.mxu0 %v373
          %417 = vmatpush1.msra.mxu0 %v372
          %418 = vmatprep.subr.mxu0 %v375
          %419 = vmatpush1.msra.mxu0 %v374
          %420 = vmatprep.subr.mxu0 %v377
          %421 = vmatpush1.msra.mxu0 %v376
          %422 = vmatprep.subr.mxu0 %v379
          %423 = vmatpush1.msra.mxu0 %v378
          %424 = vmatprep.subr.mxu0 %v381
          %425 = vmatpush1.msra.mxu0 %v380
          %426 = vmatprep.subr.mxu0 %v383
          %427 = vmatpush1.msra.mxu0 %v382
          %428 = vmatprep.subr.mxu0 %v385
          %429 = vmatpush1.msra.mxu0 %v384
          %430 = vmatprep.subr.mxu0 %v387
          %431 = vmatpush1.msra.mxu0 %v386
          %432 = vmatprep.subr.mxu0 %v389
          %433 = vmatpush1.msra.mxu0 %v388
          %434 = vmatprep.subr.mxu0 %v391
          %435 = vmatpush1.msra.mxu0 %v390
          %436 = vmatprep.subr.mxu0 %v393
          %437 = vmatpush1.msra.mxu0 %v392
          %438 = vmatprep.subr.mxu0 %v395
          %439 = vmatpush1.msra.mxu0 %v394
          %440 = vmatprep.subr.mxu0 %v397
          %441 = vmatpush1.msra.mxu0 %v396
          %442 = vmatprep.subr.mxu0 %v399
          %443 = vmatpush1.msra.mxu0 %v398
          %444 = vmatprep.subr.mxu0 0.0
          %445 = vmatpush1.msra.mxu0 0.0
          %446 = vmatprep.subr.mxu0 0.0
          %447 = vmatpush1.msra.mxu0 0.0
          %448 = vmatprep.subr.mxu0 0.0
          %449 = vmatpush1.msra.mxu0 0.0
          %450 = vmatprep.subr.mxu0 0.0
          %451 = vmatpush1.msra.mxu0 0.0
          %452 = vmatprep.subr.mxu0 0.0
          %453 = vmatpush1.msra.mxu0 0.0
          %454 = vmatprep.subr.mxu0 0.0
          %455 = vmatpush1.msra.mxu0 0.0
          %456 = vmatprep.subr.mxu0 0.0
          %457 = vmatpush1.msra.mxu0 0.0
          %458 = vmatprep.subr.mxu0 0.0
          %459 = vmatpush1.msra.mxu0 0.0
          %460 = vmatprep.subr.mxu0 0.0
          %461 = vmatpush1.msra.mxu0 0.0
          %462 = vmatprep.subr.mxu0 0.0
          %463 = vmatpush1.msra.mxu0 0.0
          %464 = vmatprep.subr.mxu0 0.0
          %465 = vmatpush1.msra.mxu0 0.0
          %466 = vmatprep.subr.mxu0 0.0
          %467 = vmatpush1.msra.mxu0 0.0
          %468 = vmatprep.subr.mxu0 0.0
          %469 = vmatpush1.msra.mxu0 0.0
          %470 = vmatprep.subr.mxu0 0.0
          %471 = vmatpush1.msra.mxu0 0.0
          %472 = vmatprep.subr.mxu0 0.0
          %473 = vmatpush1.msra.mxu0 0.0
          %474 = vmatprep.subr.mxu0 0.0
          %475 = vmatpush1.msra.mxu0 0.0
          %476 = vmatprep.mubr.f32.mxu0 0.0
          %477 = vmatmul.mubr.f32.gmra.mrb[0].mxu0 %v366
          %v478 = vpop.f32.mrb[0].mxu0
          %v479 = vadd.f32 %v405, %v478
          %v480 = vpop.f32.mrb[0].mxu0
          %v481 = vadd.f32 %v409, %v480
          %482 = vmatprep.mubr.f32.mxu0 0.0
          %483 = vmatmul.mubr.f32.gmra.mrb[0].mxu0 %v367
          %v484 = vpop.f32.mrb[0].mxu0
          %v485 = vadd.f32 %v405, %v484
          %v486 = vpop.f32.mrb[0].mxu0
          %v487 = vadd.f32 %v409, %v486
          %488 = vdwg.mxu0
          %s489 = smul.u32 %s30, 4
          %s490 = smul.addr %s489, 8
          %s491 = scalar_lea.vmem [#allocation2], %s490
          %492 = vst [vmem:[%s491] sm:$0xff] %v479
          %493 = vst [vmem:[%s491 + $0x8] sm:$0xff] %v481
          %494 = vst [vmem:[%s491 + $0x10] sm:$0xff] %v485
          %495 = vst [vmem:[%s491 + $0x18] sm:$0xff] %v487
          %v496 = vld [vmem:[#allocation3] sm:$0x3]
          %v497 = vadd.f32 %v479, %v485
          %v498 = vrot.slane %v497, 4
          %v499 = vadd.f32 %v497, %v498
          %v500 = vrot.slane %v499, 2
          %v501 = vadd.f32 %v499, %v500
          %v502 = vrot.slane %v501, 1
          %v503 = vadd.f32 %v501, %v502
          %v504 = vadd.f32 %v481, %v487
          %v505 = vrot.slane %v504, 4
          %v506 = vadd.f32 %v504, %v505
          %v507 = vrot.slane %v506, 2
          %v508 = vadd.f32 %v506, %v507
          %v509 = vrot.slane %v508, 1
          %v510 = vadd.f32 %v508, %v509
          %v513 = vcombine.low %v503, %v510
          %v515 = vunpack.c.l.s4 1966171168
          %v516 = vunpack.c.0.s8 %v515
          %v517 = vlaneseq
          %v518 = vshrl.u32 %v517, 7
          %v519 = vsub.s32 %v516, %v518
          %v520 = vrot.slane %v513, %v519
          %v522 = vunpack.c.l.s4 1966171168
          %v523 = vunpack.c.0.s8 %v522
          %v524 = vlaneseq
          %v525 = vshrl.u32 %v524, 7
          %v526 = vsub.s32 %v523, %v525
          %v527 = vrot.slane %v520, %v526
          %v529 = vadd.f32 %v496, %v527
          %v530 = vlaneseq
          %vm531 = vcmp.ge.s32.totalorder %v530, 0
          %vm532 = vcmp.lt.s32.totalorder %v530, 256
          %vm533 = vmand %vm531, %vm532
          %534 = vst.msk [vmem:[#allocation3] sm:$0x3] %vm533, %v529
          %v535 = vld [vmem:[#allocation4] sm:$0x3]
          %v536 = vmul.f32 %v479, %v479
          %v537 = vmul.f32 %v481, %v481
          %v538 = vmul.f32 %v485, %v485
          %v539 = vmul.f32 %v487, %v487
          %v540 = vadd.f32 %v536, %v538
          %v541 = vrot.slane %v540, 4
          %v542 = vadd.f32 %v540, %v541
          %v543 = vrot.slane %v542, 2
          %v544 = vadd.f32 %v542, %v543
          %v545 = vrot.slane %v544, 1
          %v546 = vadd.f32 %v544, %v545
          %v547 = vadd.f32 %v537, %v539
          %v548 = vrot.slane %v547, 4
          %v549 = vadd.f32 %v547, %v548
          %v550 = vrot.slane %v549, 2
          %v551 = vadd.f32 %v549, %v550
          %v552 = vrot.slane %v551, 1
          %v553 = vadd.f32 %v551, %v552
          %v556 = vcombine.low %v546, %v553
          %v558 = vunpack.c.l.s4 1966171168
          %v559 = vunpack.c.0.s8 %v558
          %v560 = vlaneseq
          %v561 = vshrl.u32 %v560, 7
          %v562 = vsub.s32 %v559, %v561
          %v563 = vrot.slane %v556, %v562
          %v565 = vunpack.c.l.s4 1966171168
          %v566 = vunpack.c.0.s8 %v565
          %v567 = vlaneseq
          %v568 = vshrl.u32 %v567, 7
          %v569 = vsub.s32 %v566, %v568
          %v570 = vrot.slane %v563, %v569
          %v572 = vadd.f32 %v535, %v570
          %573 = vst.msk [vmem:[#allocation4] sm:$0x3] %vm533, %v572
        $region68: #{tpu_custom_call.1} parent=47 // pred_fallthru
          _
        %p574 = scmp.eq.s32.totalorder %s29, 1
        %p575 = pnand %p574, %p352
        %p576 = pneg %p575
        // Predicated region
        $region69: #{tpu_custom_call.1} parent=47 // pred_check
          _
        $region70: #{tpu_custom_call.1} parent=47 // pred_check_branch
          %578 = sbr.rel (%p575) target = $region72
        $region71: #{tpu_custom_call.1} parent=47 // pred_region
          %v579 = vld [vmem:[#allocation3] sm:$0x3]
          %v580 = vmul.f32 %v579, 0.015625
          %v581 = vld [vmem:[#allocation4] sm:$0x3]
          %v582 = vmul.f32 %v581, 0.015625
          %v583 = vmul.f32 %v580, %v580
          %v584 = vsub.f32 %v582, %v583
          %v585 = vmax.f32 %v584, 0.0
          %v586 = vadd.f32 %v585, 1e-05
          %v587 = vrsqrt.pop %v586
          %v588 = vld [vmem:[%s3] sm:$0x3]
          %v589 = vmul.f32 %v588, %v587
          %v590 = vlaneseq
          %vm591 = vcmp.ge.s32.totalorder %v590, 0
          %vm592 = vcmp.lt.s32.totalorder %v590, 256
          %vm593 = vmand %vm591, %vm592
          %594 = vst.msk [vmem:[#allocation5] sm:$0x3] %vm593, %v589
          %v595 = vld [vmem:[%s4] sm:$0x3]
          %v596 = vmul.f32 %v580, %v589
          %v597 = vsub.f32 %v595, %v596
          %598 = vst.msk [vmem:[#allocation6] sm:$0x3] %vm593, %v597
        $region72: #{tpu_custom_call.1} parent=47 // pred_fallthru
          _
        // Predicated region
        $region73: #{tpu_custom_call.1} parent=47 // pred_check
          %p599 = pneg %p574
        $region74: #{tpu_custom_call.1} parent=47 // pred_check_branch
          %601 = sbr.rel (%p599) target = $region76
        $region75: #{tpu_custom_call.1} parent=47 // pred_region
          %s602 = smul.u32 %s30, 4
          %s603 = smul.addr %s602, 8
          %s604 = scalar_lea.vmem [#allocation2], %s603
          %v605 = vld [vmem:[%s604] sm:$0xff]
          %v606 = vld [vmem:[%s604 + $0x8] sm:$0xff]
          %v607 = vld [vmem:[%s604 + $0x10] sm:$0xff]
          %v608 = vld [vmem:[%s604 + $0x18] sm:$0xff]
          %v609 = vld [vmem:[#allocation5] sm:$0x3]
          %v611 = vlaneseq
          %v612 = vshrl.u32 %v611, 7
          %v613 = vsub.s32 0, %v612
          %v614 = vrot.slane %v609, %v613
          %v615 = vlaneseq
          %v616 = vshrl.u32 %v615, 7
          %v617 = vsub.s32 1, %v616
          %v618 = vrot.slane %v609, %v617
          %v621 = vmul.f32 %v605, %v614
          %v622 = vmul.f32 %v606, %v618
          %v623 = vmul.f32 %v607, %v614
          %v624 = vmul.f32 %v608, %v618
          %v625 = vld [vmem:[#allocation6] sm:$0x3]
          %v627 = vlaneseq
          %v628 = vshrl.u32 %v627, 7
          %v629 = vsub.s32 0, %v628
          %v630 = vrot.slane %v625, %v629
          %v631 = vlaneseq
          %v632 = vshrl.u32 %v631, 7
          %v633 = vsub.s32 1, %v632
          %v634 = vrot.slane %v625, %v633
          %v637 = vadd.f32 %v621, %v630
          %v638 = vadd.f32 %v622, %v634
          %v639 = vadd.f32 %v623, %v630
          %v640 = vadd.f32 %v624, %v634
          %v641 = vmax.f32 %v637, 0.0
          %v642 = vmax.f32 %v638, 0.0
          %v643 = vmax.f32 %v639, 0.0
          %v644 = vmax.f32 %v640, 0.0
          %v645 = vld [vmem:[#allocation12] sm:$0xff]
          %v646 = vld [vmem:[#allocation12 + $0x8] sm:$0xff]
          %v647 = vld [vmem:[#allocation12 + $0x10] sm:$0xff]
          %v648 = vld [vmem:[#allocation12 + $0x18] sm:$0xff]
          %v649 = vld [vmem:[#allocation12 + $0x20] sm:$0xff]
          %v650 = vld [vmem:[#allocation12 + $0x28] sm:$0xff]
          %v651 = vld [vmem:[#allocation12 + $0x30] sm:$0xff]
          %v652 = vld [vmem:[#allocation12 + $0x38] sm:$0xff]
          %v653 = vld [vmem:[#allocation12 + $0x40] sm:$0xff]
          %v654 = vld [vmem:[#allocation12 + $0x48] sm:$0xff]
          %v655 = vld [vmem:[#allocation12 + $0x50] sm:$0xff]
          %v656 = vld [vmem:[#allocation12 + $0x58] sm:$0xff]
          %v657 = vld [vmem:[#allocation12 + $0x60] sm:$0xff]
          %v658 = vld [vmem:[#allocation12 + $0x68] sm:$0xff]
          %v659 = vld [vmem:[#allocation12 + $0x70] sm:$0xff]
          %v660 = vld [vmem:[#allocation12 + $0x78] sm:$0xff]
          %v661 = vld [vmem:[#allocation12 + $0x80] sm:$0xff]
          %v662 = vld [vmem:[#allocation12 + $0x88] sm:$0xff]
          %v663 = vld [vmem:[#allocation12 + $0x90] sm:$0xff]
          %v664 = vld [vmem:[#allocation12 + $0x98] sm:$0xff]
          %v665 = vld [vmem:[#allocation12 + $0xa0] sm:$0xff]
          %v666 = vld [vmem:[#allocation12 + $0xa8] sm:$0xff]
          %v667 = vld [vmem:[#allocation12 + $0xb0] sm:$0xff]
          %v668 = vld [vmem:[#allocation12 + $0xb8] sm:$0xff]
          %v669 = vld [vmem:[#allocation12 + $0xc0] sm:$0xff]
          %v670 = vld [vmem:[#allocation12 + $0xc8] sm:$0xff]
          %v671 = vld [vmem:[#allocation12 + $0xd0] sm:$0xff]
          %v672 = vld [vmem:[#allocation12 + $0xd8] sm:$0xff]
          %v673 = vld [vmem:[#allocation12 + $0xe0] sm:$0xff]
          %v674 = vld [vmem:[#allocation12 + $0xe8] sm:$0xff]
          %v675 = vld [vmem:[#allocation12 + $0xf0] sm:$0xff]
          %v676 = vld [vmem:[#allocation12 + $0xf8] sm:$0xff]
          %v677 = vld [vmem:[%s6] sm:$0x1]
          %v679 = vlaneseq
          %v680 = vshrl.u32 %v679, 7
          %v681 = vsub.s32 0, %v680
          %v682 = vrot.slane %v677, %v681
          %684 = vmatprep.subr.mxu0 0.0
          %685 = vmatpush1.msra.mxu0 %v645
          %686 = vmatprep.subr.mxu0 0.0
          %687 = vmatpush1.msra.mxu0 %v646
          %688 = vmatprep.subr.mxu0 0.0
          %689 = vmatpush1.msra.mxu0 %v647
          %690 = vmatprep.subr.mxu0 0.0
          %691 = vmatpush1.msra.mxu0 %v648
          %692 = vmatprep.subr.mxu0 0.0
          %693 = vmatpush1.msra.mxu0 %v649
          %694 = vmatprep.subr.mxu0 0.0
          %695 = vmatpush1.msra.mxu0 %v650
          %696 = vmatprep.subr.mxu0 0.0
          %697 = vmatpush1.msra.mxu0 %v651
          %698 = vmatprep.subr.mxu0 0.0
          %699 = vmatpush1.msra.mxu0 %v652
          %700 = vmatprep.subr.mxu0 0.0
          %701 = vmatpush1.msra.mxu0 %v653
          %702 = vmatprep.subr.mxu0 0.0
          %703 = vmatpush1.msra.mxu0 %v654
          %704 = vmatprep.subr.mxu0 0.0
          %705 = vmatpush1.msra.mxu0 %v655
          %706 = vmatprep.subr.mxu0 0.0
          %707 = vmatpush1.msra.mxu0 %v656
          %708 = vmatprep.subr.mxu0 0.0
          %709 = vmatpush1.msra.mxu0 %v657
          %710 = vmatprep.subr.mxu0 0.0
          %711 = vmatpush1.msra.mxu0 %v658
          %712 = vmatprep.subr.mxu0 0.0
          %713 = vmatpush1.msra.mxu0 %v659
          %714 = vmatprep.subr.mxu0 0.0
          %715 = vmatpush1.msra.mxu0 %v660
          %716 = vmatprep.subr.mxu0 0.0
          %717 = vmatpush1.msra.mxu0 %v661
          %718 = vmatprep.subr.mxu0 0.0
          %719 = vmatpush1.msra.mxu0 %v662
          %720 = vmatprep.subr.mxu0 0.0
          %721 = vmatpush1.msra.mxu0 %v663
          %722 = vmatprep.subr.mxu0 0.0
          %723 = vmatpush1.msra.mxu0 %v664
          %724 = vmatprep.subr.mxu0 0.0
          %725 = vmatpush1.msra.mxu0 %v665
          %726 = vmatprep.subr.mxu0 0.0
          %727 = vmatpush1.msra.mxu0 %v666
          %728 = vmatprep.subr.mxu0 0.0
          %729 = vmatpush1.msra.mxu0 %v667
          %730 = vmatprep.subr.mxu0 0.0
          %731 = vmatpush1.msra.mxu0 %v668
          %732 = vmatprep.subr.mxu0 0.0
          %733 = vmatpush1.msra.mxu0 %v669
          %734 = vmatprep.subr.mxu0 0.0
          %735 = vmatpush1.msra.mxu0 %v670
          %736 = vmatprep.subr.mxu0 0.0
          %737 = vmatpush1.msra.mxu0 %v671
          %738 = vmatprep.subr.mxu0 0.0
          %739 = vmatpush1.msra.mxu0 %v672
          %740 = vmatprep.subr.mxu0 0.0
          %741 = vmatpush1.msra.mxu0 %v673
          %742 = vmatprep.subr.mxu0 0.0
          %743 = vmatpush1.msra.mxu0 %v674
          %744 = vmatprep.subr.mxu0 0.0
          %745 = vmatpush1.msra.mxu0 %v675
          %746 = vmatprep.subr.mxu0 0.0
          %747 = vmatpush1.msra.mxu0 %v676
          %748 = vmatprep.mubr.f32.mxu0 %v642
          %749 = vmatmul.mubr.f32.gmra.mrb[0].mxu0 %v641
          %v750 = vpop.f32.mrb[0].mxu0
          %v751 = vadd.f32 %v682, %v750
          %v752 = vpop.f32.mrb[0].mxu0
          %753 = vmatprep.mubr.f32.mxu0 %v644
          %754 = vmatmul.mubr.f32.gmra.mrb[0].mxu0 %v643
          %v755 = vpop.f32.mrb[0].mxu0
          %v756 = vadd.f32 %v682, %v755
          %v757 = vpop.f32.mrb[0].mxu0
          %758 = vdwg.mxu0
          %759 = vst [vmem:[%s345] sm:$0xff] %v751
          %760 = vst [vmem:[%s345 + $0x8] sm:$0xff] %v756
        $region76: #{tpu_custom_call.1} parent=47 // pred_fallthru
          _
        %s761 = sand.u32 %s203, 1
        %s762 = scalar_lea.sflag [#allocation9], %s761
        %s763 = sand.u32 %s203, 1
        %s764 = smul.addr %s763, 16
        %s765 = scalar_lea.vmem [#allocation13], %s764
        // Predicated region
        $region77: #{tpu_custom_call.1} parent=47 // pred_check
          %p766 = pneg %p213
        $region78: #{tpu_custom_call.1} parent=47 // pred_check_branch
          %768 = sbr.rel (%p766) target = $region80
        $region79: #{tpu_custom_call.1} parent=47 // pred_region
          %s769 = smul.u32 %s30, %s29
          %s770 = smul.u32 2, %s769
          %s772 = ssub.s32 256, 256
          %773 = vsyncadd %s762, %s772
          %s774 = smul.addr %s770, 128
          %s775 = scalar_lea.hbm %s7, %s774
          %s776 = sshll.u32 %s765, 4
          %s777 = int_to_ptr.vmem [resolvable:$true] %s776
          %782 = dma.vmem_to_hbm [thread:$0]  %s777, 256, %s775, %s762, 128, 128, 8
        $region80: #{tpu_custom_call.1} parent=47 // pred_fallthru
          _
      $region48: #{tpu_custom_call.1} parent=5 // pred_fallthru
        _
      %p783 = scmp.le.s32.totalorder 2, %s20
      // Predicated region
      $region81: #{tpu_custom_call.1} parent=5 // pred_check
        %p784 = pneg %p783
      $region82: #{tpu_custom_call.1} parent=5 // pred_check_branch
        %786 = sbr.rel (%p784) target = $region84
      $region83: #{tpu_custom_call.1} parent=5 // pred_region
        %s787 = ssub.s32 %s20, 2
        // Predicated region
        $region85: #{tpu_custom_call.1} parent=83 // pred_check
          %p788 = pneg %p219
        $region86: #{tpu_custom_call.1} parent=83 // pred_check_branch
          %790 = sbr.rel (%p788) target = $region88
        $region87: #{tpu_custom_call.1} parent=83 // pred_region
          %s791 = sand.u32 %s204, 1
          %s792 = scalar_lea.sflag [#allocation9], %s791
          %s793 = sand.u32 %s204, 1
          %s794 = smul.addr %s793, 16
          %s795 = scalar_lea.vmem [#allocation13], %s794
          %796 = dma.done %s792, 256
        $region88: #{tpu_custom_call.1} parent=83 // pred_fallthru
          _
      $region84: #{tpu_custom_call.1} parent=5 // pred_fallthru
        _
    $region6: #{tpu_custom_call.1} parent=1 // loop_footer
      %s24 = sadd.s32 1, %s20
    $region7: #{tpu_custom_call.1} parent=1 // loop_footer_branch
      %19 = sbr.rel target = $region3
    $region8: #{tpu_custom_call.1} parent=1 // loop_exit
      _
    %797 = vsyncpa [#allocation8], 1
    %s798 = scalar_lea.sflag [#allocation8], 1
    %799 = vsyncpa %s798, 1
    %800 = vsyncpa [#allocation11], 1
    %801 = vsyncpa [#allocation9], 1
    %s802 = scalar_lea.sflag [#allocation9], 1
    %803 = vsyncpa %s802, 1

</llo_original>
